<compile_context>
chip_gen: v5e
topology: v5e:2x2
jax: 0.10.0
libtpu: 0.0.40
codegen_flags: <defaults>
</compile_context>

<pallas_src>
import functools

import jax
import jax.numpy as jnp
from jax.experimental import pallas as pl
from jax.experimental.pallas import tpu as pltpu

BN_EPS = 1e-5


def _round_up(v, m):
    return (v + m - 1) // m * m


def _pick_tile_l(length, c_in, c_out, act_bytes, max_tile_l):
    """Largest lane-dense L tile whose double-buffered working set stays well inside
    the scoped-VMEM default (32 MiB, also the default on v7x's 64 MiB parts)."""
    l128 = _round_up(length, 128)
    tile = min(_round_up(max_tile_l, 128), l128)
    budget = 20 * 1024 * 1024          # leave headroom below the 32 MiB scoped default
    while tile > 128 and 2 * tile * (4 * c_in + act_bytes * c_out) > budget:
        tile = _round_up(tile // 2, 128)
    return tile


def _conv_prelu_kernel(x_ref, w_ref, b_ref, halo_ref, alpha_ref, *out_refs,
                       collect_stats, valid_len, tile_l, pad_tail):
    """One (batch, L-tile) grid step.

    x_ref     : (1, C_in, TL)     input tile (original x, zero-padded to l_pad)
    w_ref     : (3, C_out, C_in)  conv weight, tap-major
    b_ref     : (C_out, 1)        conv bias
    halo_ref  : (1, 1, C_in, 2)   x columns just left / right of this tile
    alpha_ref : (1,) in SMEM      PReLU slope (num_parameters=1)
    outputs   : act (1, C_out, TL)  [+ stats (1, C_out, 2) accumulated over L tiles]
    """
    if collect_stats:
        act_ref, stats_ref = out_refs
    else:
        (act_ref,) = out_refs

    x = x_ref[0]                                            # (C_in, TL) f32
    lane = jax.lax.broadcasted_iota(jnp.int32, x.shape, 1)
    hl = halo_ref[0, 0, :, 0:1]                             # (C_in, 1) column at l = -1
    hr = halo_ref[0, 0, :, 1:2]                             # (C_in, 1) column at l = TL

    # Shifted taps via XLU rolls; the wrapped-around column is replaced with the halo
    # column from the neighbouring tile (or the conv zero-pad).
    x_left = jnp.where(lane == 0, hl, pltpu.roll(x, 1, axis=1))                   # x[l-1]
    x_right = jnp.where(lane == tile_l - 1, hr, pltpu.roll(x, tile_l - 1, axis=1))  # x[l+1]

    acc = jnp.dot(w_ref[0], x_left, preferred_element_type=jnp.float32)
    acc += jnp.dot(w_ref[1], x, preferred_element_type=jnp.float32)
    acc += jnp.dot(w_ref[2], x_right, preferred_element_type=jnp.float32)
    acc += b_ref[...]                                       # conv bias

    alpha = alpha_ref[0]
    act = jnp.where(acc >= 0.0, acc, alpha * acc)           # PReLU, f32
    act_ref[0] = act.astype(act_ref.dtype)                  # lane-dense store (maybe bf16)

    if collect_stats:
        j = pl.program_id(1)

        @pl.when(j == 0)
        def _():
            stats_ref[...] = jnp.zeros_like(stats_ref)

        def _accumulate(a):
            # a == act (interior tiles) or length-masked act (last tile).
            psum = jnp.sum(a, axis=1, keepdims=True)         # (C_out, 1)
            psq = jnp.sum(a * act, axis=1, keepdims=True)    # (C_out, 1)
            stats_ref[0] += jnp.concatenate([psum, psq], axis=1)

        if pad_tail:
            is_last = j == pl.num_programs(1) - 1

            @pl.when(jnp.logical_not(is_last))
            def _():
                _accumulate(act)                              # no mask on interior tiles

            @pl.when(is_last)
            def _():
                pos = jax.lax.broadcasted_iota(jnp.int32, act.shape, 1) + j * tile_l
                _accumulate(jnp.where(pos < valid_len, act, 0.0))
        else:
            _accumulate(act)


def _bn_affine_kernel(act_ref, scale_ref, shift_ref, out_ref):
    # y = act * scale[c] + shift[c]   (scale/shift already fold mean/var/gamma/beta)
    out_ref[0] = act_ref[0].astype(jnp.float32) * scale_ref[...] + shift_ref[...]


def basic_conv_forward(x, weight, bias, prelu_alpha, bn_gamma, bn_beta, *,
                       batch_norm=True, act_dtype=jnp.bfloat16, max_tile_l=8192):
    """BasicConv forward.  x: (N, C_in, L) f32 -> (N, C_out, L) f32.

    act_dtype: dtype of the activation intermediate stored between the conv+PReLU
    pass and the BN-affine pass (bf16 halves that HBM round-trip; all accumulation
    and BN statistics stay f32).  Ignored when batch_norm=False (output is f32).
    """
    n, c_in, length = x.shape
    c_out = weight.shape[0]
    assert weight.shape == (c_out, c_in, 3)

    x = x.astype(jnp.float32)
    act_dtype = jnp.dtype(act_dtype) if batch_norm else jnp.dtype(jnp.float32)

    tile_l = _pick_tile_l(length, c_in, c_out, act_dtype.itemsize, max_tile_l)
    l_pad = _round_up(length, tile_l)
    grid_l = l_pad // tile_l
    pad_tail = l_pad != length

    xp = x if not pad_tail else jnp.pad(x, ((0, 0), (0, 0), (0, l_pad - length)))

    # Per-tile halo columns (tiny): halo[n, j, :, 0] = x_pad[n, :, j*TL - 1] (0 for j=0),
    # halo[n, j, :, 1] = x_pad[n, :, (j+1)*TL]      (0 for the last tile).
    # They give the conv its 1-element neighbourhood across tile boundaries w/o im2col.
    halo = jnp.zeros((n, grid_l, c_in, 2), jnp.float32)
    if grid_l > 1:
        left_cols = xp[:, :, tile_l - 1:l_pad - 1:tile_l]     # (n, c_in, grid_l-1)
        right_cols = xp[:, :, tile_l::tile_l]                 # (n, c_in, grid_l-1)
        halo = halo.at[:, 1:, :, 0].set(jnp.transpose(left_cols, (0, 2, 1)))
        halo = halo.at[:, :-1, :, 1].set(jnp.transpose(right_cols, (0, 2, 1)))

    # Tap-major weight: w3[k, o, c] = weight[o, c, k]  -> (3, C_out, C_in).
    w3 = jnp.transpose(weight.astype(jnp.float32), (2, 0, 1))
    b = bias.astype(jnp.float32).reshape(c_out, 1)
    alpha = prelu_alpha.astype(jnp.float32).reshape(1)

    grid = (n, grid_l)
    act_spec = pl.BlockSpec((1, c_out, tile_l), lambda i, j: (i, 0, j))
    in_specs = [
        pl.BlockSpec((1, c_in, tile_l), lambda i, j: (i, 0, j)),      # x tile (1x traffic)
        pl.BlockSpec((3, c_out, c_in), lambda i, j: (0, 0, 0)),       # conv weight (resident)
        pl.BlockSpec((c_out, 1), lambda i, j: (0, 0)),                # conv bias
        pl.BlockSpec((1, 1, c_in, 2), lambda i, j: (i, j, 0, 0)),     # halo columns
        pl.BlockSpec(memory_space=pltpu.MemorySpace.SMEM),            # PReLU alpha scalar
    ]

    kernel = functools.partial(_conv_prelu_kernel, collect_stats=batch_norm,
                               valid_len=length, tile_l=tile_l, pad_tail=pad_tail)

    if batch_norm:
        out_shape = (
            jax.ShapeDtypeStruct((n, c_out, l_pad), act_dtype),       # activations
            jax.ShapeDtypeStruct((n, c_out, 2), jnp.float32),         # per-batch BN sums
        )
        out_specs = (
            act_spec,
            # Same block for every L-tile -> resident accumulator; written once per batch.
            pl.BlockSpec((1, c_out, 2), lambda i, j: (i, 0, 0)),
        )
        dims = ("parallel", "arbitrary")      # stats block is revisited across L tiles
    else:
        out_shape = jax.ShapeDtypeStruct((n, c_out, l_pad), jnp.float32)
        out_specs = act_spec
        dims = ("parallel", "parallel")

    result = pl.pallas_call(
        kernel,
        grid=grid,
        in_specs=in_specs,
        out_specs=out_specs,
        out_shape=out_shape,
        compiler_params=pltpu.CompilerParams(dimension_semantics=dims),
    )(xp, w3, b, halo, alpha)

    if not batch_norm:
        # Padded tail positions (>= length) hold bias-through-PReLU values; crop them.
        return result if not pad_tail else result[:, :, :length]

    act, stats = result

    # BN finalize (tiny per-channel math) in plain JAX; training-mode biased variance.
    # NOTE: E[x^2]-E[x]^2 in f32 is fine at these sizes; switch to a shifted/Welford
    # combine if N*L becomes very large.
    # TODO(synk): running_mean / running_var (momentum) buffer updates are not tracked.
    count = jnp.float32(n * length)
    mean = jnp.sum(stats[:, :, 0], axis=0) / count
    var = jnp.maximum(jnp.sum(stats[:, :, 1], axis=0) / count - mean * mean, 0.0)
    scale = bn_gamma.astype(jnp.float32) * jax.lax.rsqrt(var + BN_EPS)
    shift = bn_beta.astype(jnp.float32) - mean * scale

    # Re-use the act buffer for the output when dtypes match (no extra HBM allocation).
    alias = {0: 0} if act_dtype == jnp.dtype(jnp.float32) else {}
    out = pl.pallas_call(
        _bn_affine_kernel,
        grid=grid,
        in_specs=[
            pl.BlockSpec((1, c_out, tile_l), lambda i, j: (i, 0, j)),
            pl.BlockSpec((c_out, 1), lambda i, j: (0, 0)),
            pl.BlockSpec((c_out, 1), lambda i, j: (0, 0)),
        ],
        out_specs=pl.BlockSpec((1, c_out, tile_l), lambda i, j: (i, 0, j)),
        out_shape=jax.ShapeDtypeStruct((n, c_out, l_pad), jnp.float32),
        input_output_aliases=alias,
        compiler_params=pltpu.CompilerParams(
            dimension_semantics=("parallel", "parallel")),
    )(act, scale.reshape(c_out, 1), shift.reshape(c_out, 1))

    return out if not pad_tail else out[:, :, :length]


def _reference_forward(x, weight, bias, prelu_alpha, bn_gamma, bn_beta,
                       *, batch_norm=True):
    """Pure-JAX reference mirroring the PyTorch module (training-mode BN)."""
    y = jax.lax.conv_general_dilated(
        x, weight, window_strides=(1,), padding=((1, 1),),
        dimension_numbers=("NCH", "OIH", "NCH"))
    y = y + bias[None, :, None]
    y = jnp.where(y >= 0.0, y, prelu_alpha * y)                   # PReLU (1 param)
    if batch_norm:
        mean = jnp.mean(y, axis=(0, 2), keepdims=True)
        var = jnp.var(y, axis=(0, 2), keepdims=True)
        y = (y - mean) / jnp.sqrt(var + BN_EPS)
        y = y * bn_gamma[None, :, None] + bn_beta[None, :, None]
    return y


if __name__ == "__main__":
    # Shapes consistent with BasicConv(channels_in=4, channels_out=8, batch_norm=True)
    N, C_IN, C_OUT = 2, 4, 8
    key = jax.random.PRNGKey(0)
    kx, kw, kb, kx2 = jax.random.split(key, 4)

    weight = 0.1 * jax.random.normal(kw, (C_OUT, C_IN, 3), dtype=jnp.float32)   # Conv1d.weight
    bias = 0.1 * jax.random.normal(kb, (C_OUT,), dtype=jnp.float32)             # Conv1d.bias
    prelu_alpha = jnp.array(0.25, dtype=jnp.float32)                            # nn.PReLU() default
    bn_gamma = jnp.linspace(0.5, 1.5, C_OUT).astype(jnp.float32)                # BatchNorm1d.weight
    bn_beta = jnp.linspace(-0.2, 0.2, C_OUT).astype(jnp.float32)                # BatchNorm1d.bias

    # Case A: module-sized input (L=16) -> single L tile.
    L = 16
    x = jax.random.normal(kx, (N, C_IN, L), dtype=jnp.float32)
    # Case B: forces the multi-tile path (2 L-tiles, halo columns, ragged last tile).
    L2 = 200
    x2 = jax.random.normal(kx2, (N, C_IN, L2), dtype=jnp.float32)

    cases = [
        (x, dict(batch_norm=True, act_dtype=jnp.float32), 1e-4),
        (x, dict(batch_norm=True, act_dtype=jnp.bfloat16), 2e-2),   # bf16 act intermediate
        (x, dict(batch_norm=False), 1e-4),
        (x2, dict(batch_norm=True, act_dtype=jnp.float32, max_tile_l=128), 1e-4),
    ]
    for xin, kw_args, tol in cases:
        out = basic_conv_forward(xin, weight, bias, prelu_alpha, bn_gamma, bn_beta,
                                 **kw_args)
        out = jax.block_until_ready(out)
        ref = _reference_forward(xin, weight, bias, prelu_alpha, bn_gamma, bn_beta,
                                 batch_norm=kw_args.get("batch_norm", True))
        assert out.shape == (xin.shape[0], C_OUT, xin.shape[2])
        assert jnp.allclose(out, ref, atol=tol, rtol=tol), \
            f"mismatch vs JAX reference for {kw_args}"

    print("KERNEL_OK")
</pallas_src>

<mosaic_0001>
module attributes {stable_mosaic.version = 11 : i64} {
  func.func @_conv_prelu_kernel(%arg0: i32, %arg1: i32, %arg2: memref<1x4x128xf32, #tpu.memory_space<vmem>>, %arg3: memref<3x8x4xf32, #tpu.memory_space<vmem>>, %arg4: memref<8x1xf32, #tpu.memory_space<vmem>>, %arg5: memref<1x1x4x2xf32, #tpu.memory_space<vmem>>, %arg6: memref<1xf32, #tpu.memory_space<smem>>, %arg7: memref<1x8x128xf32, #tpu.memory_space<vmem>>, %arg8: memref<1x8x2xf32, #tpu.memory_space<vmem>>) attributes {dimension_semantics = [#tpu.dimension_semantics<parallel>, #tpu.dimension_semantics<arbitrary>], iteration_bounds = array<i64: 2, 1>, scalar_prefetch = 0 : i64, scratch_operands = 0 : i64, tpu.core_type = #tpu.core_type<tc>, window_params = [{transform_indices = @transform_0, window_bounds = array<i64: 1, 4, 128>}, {pipeline_mode = #tpu.pipeline_mode<synchronous>, transform_indices = @transform_1, window_bounds = array<i64: 3, 8, 4>}, {pipeline_mode = #tpu.pipeline_mode<synchronous>, transform_indices = @transform_2, window_bounds = array<i64: 8, 1>}, {transform_indices = @transform_3, window_bounds = array<i64: 1, 1, 4, 2>}, {transform_indices = @transform_4, window_bounds = array<i64: 1>}, {transform_indices = @transform_5, window_bounds = array<i64: 1, 8, 128>}, {transform_indices = @transform_6, window_bounds = array<i64: 1, 8, 2>}]} {
    %c0 = arith.constant 0 : index
    %c0_0 = arith.constant 0 : index
    %c0_1 = arith.constant 0 : index
    %0 = vector.load %arg2[%c0, %c0_0, %c0_1] : memref<1x4x128xf32, #tpu.memory_space<vmem>>, vector<1x4x128xf32>
    %1 = vector.shape_cast %0 : vector<1x4x128xf32> to vector<4x128xf32>
    %2 = tpu.iota {dimensions = array<i32: 1>} : vector<4x128xi32>
    %c0_2 = arith.constant 0 : index
    %c0_3 = arith.constant 0 : index
    %c0_4 = arith.constant 0 : index
    %c0_5 = arith.constant 0 : index
    %3 = vector.load %arg5[%c0_2, %c0_3, %c0_4, %c0_5] : memref<1x1x4x2xf32, #tpu.memory_space<vmem>>, vector<1x1x4x1xf32>
    %4 = vector.shape_cast %3 : vector<1x1x4x1xf32> to vector<4x1xf32>
    %c0_6 = arith.constant 0 : index
    %c0_7 = arith.constant 0 : index
    %c0_8 = arith.constant 0 : index
    %c1 = arith.constant 1 : index
    %5 = vector.load %arg5[%c0_6, %c0_7, %c0_8, %c1] : memref<1x1x4x2xf32, #tpu.memory_space<vmem>>, vector<1x1x4x1xf32>
    %6 = vector.shape_cast %5 : vector<1x1x4x1xf32> to vector<4x1xf32>
    %c0_i32 = arith.constant 0 : i32
    %7 = vector.broadcast %c0_i32 : i32 to vector<4x128xi32>
    %8 = arith.cmpi eq, %2, %7 : vector<4x128xi32>
    %c1_i32 = arith.constant 1 : i32
    %9 = tpu.dynamic_rotate %1 by %c1_i32 dim 1 : vector<4x128xf32>, i32 -> vector<4x128xf32>
    %10 = vector.shape_cast %4 : vector<4x1xf32> to vector<4x1xf32>
    %11 = vector.broadcast %10 : vector<4x1xf32> to vector<4x128xf32>
    %12 = arith.select %8, %11, %9 : vector<4x128xi1>, vector<4x128xf32>
    %c127_i32 = arith.constant 127 : i32
    %13 = vector.broadcast %c127_i32 : i32 to vector<4x128xi32>
    %14 = arith.cmpi eq, %2, %13 : vector<4x128xi32>
    %c127_i32_9 = arith.constant 127 : i32
    %15 = tpu.dynamic_rotate %1 by %c127_i32_9 dim 1 : vector<4x128xf32>, i32 -> vector<4x128xf32>
    %16 = vector.shape_cast %6 : vector<4x1xf32> to vector<4x1xf32>
    %17 = vector.broadcast %16 : vector<4x1xf32> to vector<4x128xf32>
    %18 = arith.select %14, %17, %15 : vector<4x128xi1>, vector<4x128xf32>
    %c0_10 = arith.constant 0 : index
    %c0_11 = arith.constant 0 : index
    %c0_12 = arith.constant 0 : index
    %19 = vector.load %arg3[%c0_10, %c0_11, %c0_12] : memref<3x8x4xf32, #tpu.memory_space<vmem>>, vector<1x8x4xf32>
    %20 = vector.shape_cast %19 : vector<1x8x4xf32> to vector<8x4xf32>
    %cst = arith.constant dense<0.000000e+00> : vector<8x128xf32>
    %21 = tpu.matmul %20, %12, %cst {dimension_numbers = #tpu.dot_dimension_numbers<[1], [0], [0], [1], [0, 0, 1, 1], [], []>} : vector<8x4xf32>, vector<4x128xf32>, vector<8x128xf32> -> vector<8x128xf32>
    %c1_13 = arith.constant 1 : index
    %c0_14 = arith.constant 0 : index
    %c0_15 = arith.constant 0 : index
    %22 = vector.load %arg3[%c1_13, %c0_14, %c0_15] : memref<3x8x4xf32, #tpu.memory_space<vmem>>, vector<1x8x4xf32>
    %23 = vector.shape_cast %22 : vector<1x8x4xf32> to vector<8x4xf32>
    %cst_16 = arith.constant dense<0.000000e+00> : vector<8x128xf32>
    %24 = tpu.matmul %23, %1, %cst_16 {dimension_numbers = #tpu.dot_dimension_numbers<[1], [0], [0], [1], [0, 0, 1, 1], [], []>} : vector<8x4xf32>, vector<4x128xf32>, vector<8x128xf32> -> vector<8x128xf32>
    %25 = arith.addf %21, %24 : vector<8x128xf32>
    %c2 = arith.constant 2 : index
    %c0_17 = arith.constant 0 : index
    %c0_18 = arith.constant 0 : index
    %26 = vector.load %arg3[%c2, %c0_17, %c0_18] : memref<3x8x4xf32, #tpu.memory_space<vmem>>, vector<1x8x4xf32>
    %27 = vector.shape_cast %26 : vector<1x8x4xf32> to vector<8x4xf32>
    %cst_19 = arith.constant dense<0.000000e+00> : vector<8x128xf32>
    %28 = tpu.matmul %27, %18, %cst_19 {dimension_numbers = #tpu.dot_dimension_numbers<[1], [0], [0], [1], [0, 0, 1, 1], [], []>} : vector<8x4xf32>, vector<4x128xf32>, vector<8x128xf32> -> vector<8x128xf32>
    %29 = arith.addf %25, %28 : vector<8x128xf32>
    %c0_20 = arith.constant 0 : index
    %c0_21 = arith.constant 0 : index
    %30 = vector.load %arg4[%c0_20, %c0_21] : memref<8x1xf32, #tpu.memory_space<vmem>>, vector<8x1xf32>
    %31 = vector.broadcast %30 : vector<8x1xf32> to vector<8x128xf32>
    %32 = arith.addf %29, %31 : vector<8x128xf32>
    %c0_22 = arith.constant 0 : index
    %33 = memref.load %arg6[%c0_22] : memref<1xf32, #tpu.memory_space<smem>>
    %cst_23 = arith.constant 0.000000e+00 : f32
    %34 = vector.broadcast %cst_23 : f32 to vector<8x128xf32>
    %35 = arith.cmpf oge, %32, %34 : vector<8x128xf32>
    %36 = vector.broadcast %33 : f32 to vector<8x128xf32>
    %37 = arith.mulf %36, %32 : vector<8x128xf32>
    %38 = arith.select %35, %32, %37 : vector<8x128xi1>, vector<8x128xf32>
    %c0_24 = arith.constant 0 : index
    %c0_25 = arith.constant 0 : index
    %c0_26 = arith.constant 0 : index
    %39 = vector.load %arg7[%c0_24, %c0_25, %c0_26] : memref<1x8x128xf32, #tpu.memory_space<vmem>>, vector<1x8x128xf32>
    %40 = vector.shape_cast %39 : vector<1x8x128xf32> to vector<8x128xf32>
    %41 = vector.shape_cast %38 : vector<8x128xf32> to vector<1x8x128xf32>
    tpu.vector_store %arg7[%c0_24, %c0_25, %c0_26], %41 {strides = array<i32>} : memref<1x8x128xf32, #tpu.memory_space<vmem>>, vector<1x8x128xf32>,
    %c0_i32_27 = arith.constant 0 : i32
    %42 = arith.cmpi eq, %arg1, %c0_i32_27 : i32
    %43 = arith.extui %42 : i1 to i32
    %c0_i32_28 = arith.constant 0 : i32
    %44 = arith.cmpi ne, %43, %c0_i32_28 : i32
    scf.if %44 {
      %cst_32 = arith.constant 0.000000e+00 : f32
      %51 = vector.broadcast %cst_32 : f32 to vector<1x8x2xf32>
      %c0_33 = arith.constant 0 : index
      %c0_34 = arith.constant 0 : index
      %c0_35 = arith.constant 0 : index
      %52 = vector.load %arg8[%c0_33, %c0_34, %c0_35] : memref<1x8x2xf32, #tpu.memory_space<vmem>>, vector<1x8x2xf32>
      tpu.vector_store %arg8[%c0_33, %c0_34, %c0_35], %51 {strides = array<i32>} : memref<1x8x2xf32, #tpu.memory_space<vmem>>, vector<1x8x2xf32>,
    } else {
    }
    %c0_i32_29 = arith.constant 0 : i32
    %45 = arith.cmpi eq, %arg1, %c0_i32_29 : i32
    %true = arith.constant true
    %46 = arith.xori %45, %true : i1
    %47 = arith.extui %46 : i1 to i32
    %c0_i32_30 = arith.constant 0 : i32
    %48 = arith.cmpi ne, %47, %c0_i32_30 : i32
    scf.if %48 {
      %cst_32 = arith.constant dense<0.000000e+00> : vector<8xf32>
      %51 = vector.multi_reduction <add>, %38, %cst_32 [1] : vector<8x128xf32> to vector<8xf32>
      %52 = vector.shape_cast %51 : vector<8xf32> to vector<8x1xf32>
      %53 = arith.mulf %38, %38 : vector<8x128xf32>
      %cst_33 = arith.constant dense<0.000000e+00> : vector<8xf32>
      %54 = vector.multi_reduction <add>, %53, %cst_33 [1] : vector<8x128xf32> to vector<8xf32>
      %55 = vector.shape_cast %54 : vector<8xf32> to vector<8x1xf32>
      %c0_34 = arith.constant 0 : index
      %c0_35 = arith.constant 0 : index
      %c0_36 = arith.constant 0 : index
      %56 = vector.load %arg8[%c0_34, %c0_35, %c0_36] : memref<1x8x2xf32, #tpu.memory_space<vmem>>, vector<1x8x2xf32>
      %57 = vector.shape_cast %56 : vector<1x8x2xf32> to vector<8x2xf32>
      %58 = tpu.concatenate %52, %55 in 1 : vector<8x1xf32>, vector<8x1xf32> -> vector<8x2xf32>
      %59 = arith.addf %57, %58 : vector<8x2xf32>
      %c0_37 = arith.constant 0 : index
      %c0_38 = arith.constant 0 : index
      %c0_39 = arith.constant 0 : index
      %60 = vector.load %arg8[%c0_37, %c0_38, %c0_39] : memref<1x8x2xf32, #tpu.memory_space<vmem>>, vector<1x8x2xf32>
      %61 = vector.shape_cast %60 : vector<1x8x2xf32> to vector<8x2xf32>
      %62 = vector.shape_cast %59 : vector<8x2xf32> to vector<1x8x2xf32>
      tpu.vector_store %arg8[%c0_37, %c0_38, %c0_39], %62 {strides = array<i32>} : memref<1x8x2xf32, #tpu.memory_space<vmem>>, vector<1x8x2xf32>,
    } else {
    }
    %49 = arith.extui %45 : i1 to i32
    %c0_i32_31 = arith.constant 0 : i32
    %50 = arith.cmpi ne, %49, %c0_i32_31 : i32
    scf.if %50 {
      %51 = tpu.iota {dimensions = array<i32: 1>} : vector<8x128xi32>
      %c128_i32 = arith.constant 128 : i32
      %52 = arith.muli %arg1, %c128_i32 : i32
      %53 = vector.broadcast %52 : i32 to vector<8x128xi32>
      %54 = arith.addi %51, %53 : vector<8x128xi32>
      %c16_i32 = arith.constant 16 : i32
      %55 = vector.broadcast %c16_i32 : i32 to vector<8x128xi32>
      %56 = arith.cmpi slt, %54, %55 : vector<8x128xi32>
      %cst_32 = arith.constant 0.000000e+00 : f32
      %57 = vector.broadcast %cst_32 : f32 to vector<8x128xf32>
      %58 = arith.select %56, %38, %57 : vector<8x128xi1>, vector<8x128xf32>
      %cst_33 = arith.constant dense<0.000000e+00> : vector<8xf32>
      %59 = vector.multi_reduction <add>, %58, %cst_33 [1] : vector<8x128xf32> to vector<8xf32>
      %60 = vector.shape_cast %59 : vector<8xf32> to vector<8x1xf32>
      %61 = arith.mulf %58, %38 : vector<8x128xf32>
      %cst_34 = arith.constant dense<0.000000e+00> : vector<8xf32>
      %62 = vector.multi_reduction <add>, %61, %cst_34 [1] : vector<8x128xf32> to vector<8xf32>
      %63 = vector.shape_cast %62 : vector<8xf32> to vector<8x1xf32>
      %c0_35 = arith.constant 0 : index
      %c0_36 = arith.constant 0 : index
      %c0_37 = arith.constant 0 : index
      %64 = vector.load %arg8[%c0_35, %c0_36, %c0_37] : memref<1x8x2xf32, #tpu.memory_space<vmem>>, vector<1x8x2xf32>
      %65 = vector.shape_cast %64 : vector<1x8x2xf32> to vector<8x2xf32>
      %66 = tpu.concatenate %60, %63 in 1 : vector<8x1xf32>, vector<8x1xf32> -> vector<8x2xf32>
      %67 = arith.addf %65, %66 : vector<8x2xf32>
      %c0_38 = arith.constant 0 : index
      %c0_39 = arith.constant 0 : index
      %c0_40 = arith.constant 0 : index
      %68 = vector.load %arg8[%c0_38, %c0_39, %c0_40] : memref<1x8x2xf32, #tpu.memory_space<vmem>>, vector<1x8x2xf32>
      %69 = vector.shape_cast %68 : vector<1x8x2xf32> to vector<8x2xf32>
      %70 = vector.shape_cast %67 : vector<8x2xf32> to vector<1x8x2xf32>
      tpu.vector_store %arg8[%c0_38, %c0_39, %c0_40], %70 {strides = array<i32>} : memref<1x8x2xf32, #tpu.memory_space<vmem>>, vector<1x8x2xf32>,
    } else {
    }
    return
  }
  func.func @transform_0(%arg0: i32, %arg1: i32) -> (i32, i32, i32) {
    %c0_i32 = arith.constant 0 : i32
    %c0_i32_0 = arith.constant 0 : i32
    return %arg0, %c0_i32, %arg1 : i32, i32, i32
  }
  func.func @transform_1(%arg0: i32, %arg1: i32) -> (i32, i32, i32) {
    %c0_i32 = arith.constant 0 : i32
    %c0_i32_0 = arith.constant 0 : i32
    %c0_i32_1 = arith.constant 0 : i32
    %c0_i32_2 = arith.constant 0 : i32
    return %c0_i32, %c0_i32_0, %c0_i32_1 : i32, i32, i32
  }
  func.func @transform_2(%arg0: i32, %arg1: i32) -> (i32, i32) {
    %c0_i32 = arith.constant 0 : i32
    %c0_i32_0 = arith.constant 0 : i32
    %c0_i32_1 = arith.constant 0 : i32
    return %c0_i32, %c0_i32_0 : i32, i32
  }
  func.func @transform_3(%arg0: i32, %arg1: i32) -> (i32, i32, i32, i32) {
    %c0_i32 = arith.constant 0 : i32
    %c0_i32_0 = arith.constant 0 : i32
    %c0_i32_1 = arith.constant 0 : i32
    return %arg0, %arg1, %c0_i32, %c0_i32_0 : i32, i32, i32, i32
  }
  func.func @transform_4(%arg0: i32, %arg1: i32) -> i32 {
    %c0_i32 = arith.constant 0 : i32
    %c0_i32_0 = arith.constant 0 : i32
    return %c0_i32 : i32
  }
  func.func @transform_5(%arg0: i32, %arg1: i32) -> (i32, i32, i32) {
    %c0_i32 = arith.constant 0 : i32
    %c0_i32_0 = arith.constant 0 : i32
    return %arg0, %c0_i32, %arg1 : i32, i32, i32
  }
  func.func @transform_6(%arg0: i32, %arg1: i32) -> (i32, i32, i32) {
    %c0_i32 = arith.constant 0 : i32
    %c0_i32_0 = arith.constant 0 : i32
    %c0_i32_1 = arith.constant 0 : i32
    return %arg0, %c0_i32, %c0_i32_0 : i32, i32, i32
  }
}

</mosaic_0001>

<llo_original>
// kernel: tpu_custom_call.1
$region0: #{tpu_custom_call.1}
  #allocation0 [shape = 'u32[]', space=smem, size = 0x4, offset = 0x4, fixed_abs, tag = 'smem constant byte address 0x4 - core index']
  #allocation1 [shape = 'u32[72,128]{1,0:T(1,128)}', space=vmem, size = 0x9000, scoped, tag = 'internal scratch']
  #allocation2 [shape = 'f32[1]{0:T(128)S(6)}', space=smem, size = 0x200, scoped, tag = 'scoped memory for tpu_custom_call.1']
  %s0 = inlined_call_operand.vmem [shape: f32[2,4,128], index: 0, kind: input, shape index: {}]
  %s1 = inlined_call_operand.vmem [shape: f32[3,8,4], index: 1, kind: input, shape index: {}]
  %s2 = inlined_call_operand.vmem [shape: f32[8,1], index: 2, kind: input, shape index: {}]
  %s3 = inlined_call_operand.vmem [shape: f32[2,1,4,2], index: 3, kind: input, shape index: {}]
  %s4 = inlined_call_operand.<no memory space> [shape: f32[1], index: 4, kind: input, shape index: {}]
  %s5 = inlined_call_operand.hbm [shape: f32[2,8,128], index: 5, kind: output, shape index: {0}]
  %s6 = inlined_call_operand.vmem [shape: f32[2,8,2], index: 6, kind: output, shape index: {1}]
  %7 = xla_tuple %s5, %s6
  %s8 = sld [smem:[#allocation0]]
  $region73: #{tpu_custom_call.1} parent=0
    _
  %s10 = ssub.s32 1, %s8
  %s11 = scalar_select 0, %s10, %s8
  %12 = sst [smem:[#allocation2]] %s4
  $region1: #{tpu_custom_call.1} parent=0
    #allocation3 [shape = 'u8[8192]{0}', space=vmem, size = 0x2000, scoped, tag = 'output window, operand 0']
    #allocation4 [shape = 's32[2]{0}', space=sflag, size = 0x8, scoped, tag = 'scoped memory for tpu_custom_call.1']
    %13 = vsyncpa [#allocation4], 0
    %s14 = scalar_lea.sflag [#allocation4], 1
    %15 = vsyncpa %s14, 0
    loop: start=0, step=1, limit=4
    $region2: #{tpu_custom_call.1} parent=1 // loop_pre_header
      _
    $region3: #{tpu_custom_call.1} parent=1 // loop_header
      %s17 = sphi 0, %s21
      %p18 = scmp.ge.s32.totalorder %s17, 4
      %s24 = sphi 0, %s36
      %s25 = sphi 0, %s32
      %s26 = sphi 0, %s24
      %s27 = sphi 0, %s25
      %s28 = sphi 0, %s26
      %s29 = sphi 0, %s27
      %s41 = sphi 0, %s43
      %s44 = sphi 0, %s41
      %s45 = sphi 0, %s44
      %s61 = sphi 0, %s45
      %s65 = sphi 0, %s65
      %s67 = sphi 0, %s65
      %s68 = sphi 0, %s67
      %s82 = sphi 0, %s68
      %s86 = sphi 0, %s86
      %s88 = sphi 0, %s86
      %s89 = sphi 0, %s88
      %s103 = sphi 0, %s89
      %s111 = sphi 0, %s113
      %s114 = sphi 0, %s111
      %s115 = sphi 0, %s114
      %s131 = sphi 0, %s115
      %s135 = sphi 0, %s135
      %s137 = sphi 0, %s135
      %s138 = sphi 0, %s137
      %s152 = sphi 0, %s138
      %s160 = sphi 0, %s162
      %s163 = sphi 0, %s160
      %s164 = sphi 0, %s163
      %s180 = sphi 0, %s164
      %s186 = sphi 0, %s188
      %s189 = sphi 0, %s186
      %s190 = sphi 0, %s189
      %s206 = sphi 0, %s190
    $region4: #{tpu_custom_call.1} parent=1 // loop_header_branch
      %20 = sbr.rel (%p18) target = $region8
    $region5: #{tpu_custom_call.1} parent=1 // loop_body
      %s22 = ssub.s32 %s17, 1
      %s23 = ssub.s32 %s17, 2
      %s30 = sadd.s32 1, %s25
      %p31 = scmp.ge.s32.totalorder %s30, 1
      %s32 = scalar_select %p31, 0, %s30
      %s33 = sadd.s32 1, %s24
      %s34 = scalar_select %p31, %s33, %s24
      %p35 = scmp.ge.s32.totalorder %s34, 2
      %s36 = scalar_select %p35, 0, %s34
      %s37 = ssub.s32 %s24, %s36
      %s38 = ssub.s32 %s25, %s32
      %s39 = sor.u32 %s37, %s38
      %p40 = scmp.eq.s32.totalorder %s39, 0
      %s42 = sadd.s32 %s41, 1
      %s43 = scalar_select %p40, %s41, %s42
      %p46 = pneg %p40
      %p47 = scmp.eq.s32.totalorder %s17, 1
      %p48 = por %p46, %p47
      %p49 = scmp.ne.s32.totalorder %s41, %s44
      %p50 = scmp.eq.s32.totalorder %s17, 0
      %p51 = por %p49, %p50
      %p52 = scmp.ne.s32.totalorder %s41, %s44
      %p53 = scmp.eq.s32.totalorder %s22, 1
      %p54 = por %p52, %p53
      %p55 = scmp.ne.s32.totalorder %s44, %s45
      %p56 = scmp.eq.s32.totalorder %s22, 0
      %p57 = por %p55, %p56
      %p58 = scmp.ne.s32.totalorder %s44, %s45
      %p59 = scmp.eq.s32.totalorder %s23, 1
      %p60 = por %p58, %p59
      %p62 = scmp.ne.s32.totalorder %s45, %s61
      %p63 = scmp.eq.s32.totalorder %s23, 0
      %p64 = por %p62, %p63
      %s66 = sadd.s32 %s65, 1
      %p69 = scmp.eq.s32.totalorder %s17, 1
      %p70 = scmp.ne.s32.totalorder %s65, %s67
      %p71 = scmp.eq.s32.totalorder %s17, 0
      %p72 = por %p70, %p71
      %p73 = scmp.ne.s32.totalorder %s65, %s67
      %p74 = scmp.eq.s32.totalorder %s22, 1
      %p75 = por %p73, %p74
      %p76 = scmp.ne.s32.totalorder %s67, %s68
      %p77 = scmp.eq.s32.totalorder %s22, 0
      %p78 = por %p76, %p77
      %p79 = scmp.ne.s32.totalorder %s67, %s68
      %p80 = scmp.eq.s32.totalorder %s23, 1
      %p81 = por %p79, %p80
      %p83 = scmp.ne.s32.totalorder %s68, %s82
      %p84 = scmp.eq.s32.totalorder %s23, 0
      %p85 = por %p83, %p84
      %s87 = sadd.s32 %s86, 1
      %p90 = scmp.eq.s32.totalorder %s17, 1
      %p91 = scmp.ne.s32.totalorder %s86, %s88
      %p92 = scmp.eq.s32.totalorder %s17, 0
      %p93 = por %p91, %p92
      %p94 = scmp.ne.s32.totalorder %s86, %s88
      %p95 = scmp.eq.s32.totalorder %s22, 1
      %p96 = por %p94, %p95
      %p97 = scmp.ne.s32.totalorder %s88, %s89
      %p98 = scmp.eq.s32.totalorder %s22, 0
      %p99 = por %p97, %p98
      %p100 = scmp.ne.s32.totalorder %s88, %s89
      %p101 = scmp.eq.s32.totalorder %s23, 1
      %p102 = por %p100, %p101
      %p104 = scmp.ne.s32.totalorder %s89, %s103
      %p105 = scmp.eq.s32.totalorder %s23, 0
      %p106 = por %p104, %p105
      %s107 = ssub.s32 %s24, %s36
      %s108 = ssub.s32 %s25, %s32
      %s109 = sor.u32 %s107, %s108
      %p110 = scmp.eq.s32.totalorder %s109, 0
      %s112 = sadd.s32 %s111, 1
      %s113 = scalar_select %p110, %s111, %s112
      %p116 = pneg %p110
      %p117 = scmp.eq.s32.totalorder %s17, 1
      %p118 = por %p116, %p117
      %p119 = scmp.ne.s32.totalorder %s111, %s114
      %p120 = scmp.eq.s32.totalorder %s17, 0
      %p121 = por %p119, %p120
      %p122 = scmp.ne.s32.totalorder %s111, %s114
      %p123 = scmp.eq.s32.totalorder %s22, 1
      %p124 = por %p122, %p123
      %p125 = scmp.ne.s32.totalorder %s114, %s115
      %p126 = scmp.eq.s32.totalorder %s22, 0
      %p127 = por %p125, %p126
      %p128 = scmp.ne.s32.totalorder %s114, %s115
      %p129 = scmp.eq.s32.totalorder %s23, 1
      %p130 = por %p128, %p129
      %p132 = scmp.ne.s32.totalorder %s115, %s131
      %p133 = scmp.eq.s32.totalorder %s23, 0
      %p134 = por %p132, %p133
      %s136 = sadd.s32 %s135, 1
      %p139 = scmp.eq.s32.totalorder %s17, 1
      %p140 = scmp.ne.s32.totalorder %s135, %s137
      %p141 = scmp.eq.s32.totalorder %s17, 0
      %p142 = por %p140, %p141
      %p143 = scmp.ne.s32.totalorder %s135, %s137
      %p144 = scmp.eq.s32.totalorder %s22, 1
      %p145 = por %p143, %p144
      %p146 = scmp.ne.s32.totalorder %s137, %s138
      %p147 = scmp.eq.s32.totalorder %s22, 0
      %p148 = por %p146, %p147
      %p149 = scmp.ne.s32.totalorder %s137, %s138
      %p150 = scmp.eq.s32.totalorder %s23, 1
      %p151 = por %p149, %p150
      %p153 = scmp.ne.s32.totalorder %s138, %s152
      %p154 = scmp.eq.s32.totalorder %s23, 0
      %p155 = por %p153, %p154
      %s156 = ssub.s32 %s24, %s36
      %s157 = ssub.s32 %s25, %s32
      %s158 = sor.u32 %s156, %s157
      %p159 = scmp.eq.s32.totalorder %s158, 0
      %s161 = sadd.s32 %s160, 1
      %s162 = scalar_select %p159, %s160, %s161
      %p165 = pneg %p159
      %p166 = scmp.eq.s32.totalorder %s17, 1
      %p167 = por %p165, %p166
      %p168 = scmp.ne.s32.totalorder %s160, %s163
      %p169 = scmp.eq.s32.totalorder %s17, 0
      %p170 = por %p168, %p169
      %p171 = scmp.ne.s32.totalorder %s160, %s163
      %p172 = scmp.eq.s32.totalorder %s22, 1
      %p173 = por %p171, %p172
      %p174 = scmp.ne.s32.totalorder %s163, %s164
      %p175 = scmp.eq.s32.totalorder %s22, 0
      %p176 = por %p174, %p175
      %p177 = scmp.ne.s32.totalorder %s163, %s164
      %p178 = scmp.eq.s32.totalorder %s23, 1
      %p179 = por %p177, %p178
      %p181 = scmp.ne.s32.totalorder %s164, %s180
      %p182 = scmp.eq.s32.totalorder %s23, 0
      %p183 = por %p181, %p182
      %s184 = ssub.s32 %s24, %s36
      %p185 = scmp.eq.s32.totalorder %s184, 0
      %s187 = sadd.s32 %s186, 1
      %s188 = scalar_select %p185, %s186, %s187
      %p191 = pneg %p185
      %p192 = scmp.eq.s32.totalorder %s17, 1
      %p193 = por %p191, %p192
      %p194 = scmp.ne.s32.totalorder %s186, %s189
      %p195 = scmp.eq.s32.totalorder %s17, 0
      %p196 = por %p194, %p195
      %p197 = scmp.ne.s32.totalorder %s186, %s189
      %p198 = scmp.eq.s32.totalorder %s22, 1
      %p199 = por %p197, %p198
      %p200 = scmp.ne.s32.totalorder %s189, %s190
      %p201 = scmp.eq.s32.totalorder %s22, 0
      %p202 = por %p200, %p201
      %p203 = scmp.ne.s32.totalorder %s189, %s190
      %p204 = scmp.eq.s32.totalorder %s23, 1
      %p205 = por %p203, %p204
      %p207 = scmp.ne.s32.totalorder %s190, %s206
      %p208 = scmp.eq.s32.totalorder %s23, 0
      %p209 = por %p207, %p208
      %p210 = scmp.le.s32.totalorder 1, %s17
      %p211 = scmp.lt.s32.totalorder %s17, 3
      %p212 = pnand %p210, %p211
      %p213 = pneg %p212
      // Predicated region
      $region9: #{tpu_custom_call.1} parent=5 // pred_check
        _
      $region10: #{tpu_custom_call.1} parent=5 // pred_check_branch
        %215 = sbr.rel (%p212) target = $region12
      $region11: #{tpu_custom_call.1} parent=5 // pred_region
        %s216 = ssub.s32 %s17, 1
        // Predicated region
        $region13: #{tpu_custom_call.1} parent=11 // pred_check
          %p217 = pneg %p78
        $region14: #{tpu_custom_call.1} parent=11 // pred_check_branch
          %219 = sbr.rel (%p217) target = $region16
        $region15: #{tpu_custom_call.1} parent=11 // pred_region
          _
        $region16: #{tpu_custom_call.1} parent=11 // pred_fallthru
          _
        // Predicated region
        $region17: #{tpu_custom_call.1} parent=11 // pred_check
          %p220 = pneg %p99
        $region18: #{tpu_custom_call.1} parent=11 // pred_check_branch
          %222 = sbr.rel (%p220) target = $region20
        $region19: #{tpu_custom_call.1} parent=11 // pred_region
          _
        $region20: #{tpu_custom_call.1} parent=11 // pred_fallthru
          _
        // Predicated region
        $region21: #{tpu_custom_call.1} parent=11 // pred_check
          %p223 = pneg %p148
        $region22: #{tpu_custom_call.1} parent=11 // pred_check_branch
          %225 = sbr.rel (%p223) target = $region24
        $region23: #{tpu_custom_call.1} parent=11 // pred_region
          _
        $region24: #{tpu_custom_call.1} parent=11 // pred_fallthru
          _
      $region12: #{tpu_custom_call.1} parent=5 // pred_fallthru
        _
      %p226 = scmp.lt.s32.totalorder %s17, 2
      // Predicated region
      $region25: #{tpu_custom_call.1} parent=5 // pred_check
        %p227 = pneg %p226
      $region26: #{tpu_custom_call.1} parent=5 // pred_check_branch
        %229 = sbr.rel (%p227) target = $region28
      $region27: #{tpu_custom_call.1} parent=5 // pred_region
        // Predicated region
        $region29: #{tpu_custom_call.1} parent=27 // pred_check
          %p230 = pneg %p51
        $region30: #{tpu_custom_call.1} parent=27 // pred_check_branch
          %232 = sbr.rel (%p230) target = $region32
        $region31: #{tpu_custom_call.1} parent=27 // pred_region
          %p233 = scmp.lt.s32.totalorder %s24, 1
          %s234 = scalar_select %p233, %s24, 1
          %p235 = scmp.lt.s32.totalorder %s25, 0
          %s236 = scalar_select %p235, %s25, 0
          %s237 = sadd.s32 %s236, %s234
          %s238 = smul.addr %s237, 4
          %s239 = scalar_lea.vmem %s0, %s238
        $region32: #{tpu_custom_call.1} parent=27 // pred_fallthru
          _
        // Predicated region
        $region33: #{tpu_custom_call.1} parent=27 // pred_check
          %p240 = pneg %p121
        $region34: #{tpu_custom_call.1} parent=27 // pred_check_branch
          %242 = sbr.rel (%p240) target = $region36
        $region35: #{tpu_custom_call.1} parent=27 // pred_region
          %p243 = scmp.lt.s32.totalorder %s24, 1
          %s244 = scalar_select %p243, %s24, 1
          %p245 = scmp.lt.s32.totalorder %s25, 0
          %s246 = scalar_select %p245, %s25, 0
          %s247 = sadd.s32 %s246, %s244
          %s248 = smul.addr %s247, 4
          %s249 = scalar_lea.vmem %s3, %s248
        $region36: #{tpu_custom_call.1} parent=27 // pred_fallthru
          _
      $region28: #{tpu_custom_call.1} parent=5 // pred_fallthru
        _
      %p250 = scmp.le.s32.totalorder 1, %s17
      %p251 = scmp.lt.s32.totalorder %s17, 3
      %p252 = pnand %p250, %p251
      %p253 = pneg %p252
      // Predicated region
      $region37: #{tpu_custom_call.1} parent=5 // pred_check
        _
      $region38: #{tpu_custom_call.1} parent=5 // pred_check_branch
        %255 = sbr.rel (%p252) target = $region40
      $region39: #{tpu_custom_call.1} parent=5 // pred_region
        %s256 = ssub.s32 %s17, 1
        %p257 = scmp.lt.s32.totalorder %s26, 1
        %s258 = scalar_select %p257, %s26, 1
        %p259 = scmp.lt.s32.totalorder %s27, 0
        %s260 = scalar_select %p259, %s27, 0
        %s261 = sadd.s32 %s260, %s258
        %s262 = smul.addr %s261, 4
        %s263 = scalar_lea.vmem %s0, %s262
        %p264 = pneg %p57
        %p265 = pneg %p54
        %p266 = pneg %p78
        %p267 = pneg %p75
        %p268 = pneg %p99
        %p269 = pneg %p96
        %p270 = scmp.lt.s32.totalorder %s26, 1
        %s271 = scalar_select %p270, %s26, 1
        %p272 = scmp.lt.s32.totalorder %s27, 0
        %s273 = scalar_select %p272, %s27, 0
        %s274 = sadd.s32 %s273, %s271
        %s275 = smul.addr %s274, 4
        %s276 = scalar_lea.vmem %s3, %s275
        %p277 = pneg %p127
        %p278 = pneg %p124
        %p279 = pneg %p148
        %p280 = pneg %p145
        %p281 = pneg %p176
        %p282 = pneg %p173
        %s283 = sand.u32 %s163, 1
        %s284 = scalar_lea.sflag [#allocation4], %s283
        %s285 = sand.u32 %s163, 1
        %s286 = smul.addr %s285, 8
        %s287 = scalar_lea.vmem [#allocation3], %s286
        %p288 = pneg %p202
        %p289 = pneg %p199
        %p290 = scmp.lt.s32.totalorder %s26, 1
        %s291 = scalar_select %p290, %s26, 1
        %s292 = smul.addr %s291, 8
        %s293 = scalar_lea.vmem %s6, %s292
        %p294 = scmp.lt.s32.totalorder %s26, 1
        %s295 = scalar_select %p294, %s26, 1
        %p296 = scmp.lt.s32.totalorder %s27, 0
        %s297 = scalar_select %p296, %s27, 0
        %s298 = sadd.s32 %s297, %s295
        %s299 = smul.addr %s298, 4
        %s300 = scalar_lea.vmem %s0, %s299
        %p301 = scmp.lt.s32.totalorder %s26, 1
        %s302 = scalar_select %p301, %s26, 1
        %p303 = scmp.lt.s32.totalorder %s27, 0
        %s304 = scalar_select %p303, %s27, 0
        %s305 = sadd.s32 %s304, %s302
        %s306 = smul.addr %s305, 4
        %s307 = scalar_lea.vmem %s3, %s306
        %p308 = scmp.lt.s32.totalorder %s26, 1
        %s309 = scalar_select %p308, %s26, 1
        %s310 = smul.addr %s309, 8
        %s311 = scalar_lea.vmem %s6, %s310
        %v312 = vld [vmem:[%s300] sm:$0xf]
        %v313 = vlaneseq
        %v314 = vand.u32 %v313, 127
        %v315 = vld [vmem:[%s307] sm:$0xf]
        %vm316 = vcmp.eq.s32.totalorder %v314, 0
        %317 = vrot.lane.b32.xlu0 %v312, 1
        %v318 = vpop.permute.xlu0 %317
        %320 = vset.pattern.permute.xlu0 0
        %321 = vperm.xlu0 %320, %v315
        %v322 = vpop.permute.xlu0 %321
        %v324 = vsel %vm316, %v322, %v318
        %vm325 = vcmp.eq.s32.totalorder %v314, 127
        %326 = vrot.lane.b32.xlu0 %v312, 127
        %v327 = vpop.permute.xlu0 %326
        %328 = vset.pattern.permute.xlu0 1
        %329 = vperm.xlu0 %328, %v315
        %v330 = vpop.permute.xlu0 %329
        %v332 = vsel %vm325, %v330, %v327
        %v333 = vld [vmem:[%s1] sm:$0xff]
        %s334 = scalar_lea.vmem %s1, 8
        %v335 = vld [vmem:[%s334] sm:$0xff]
        %vm336 = vcmask 31744
        %v338 = vsel %vm336, %v335, 0
        %vm340 = vcmask 1043456
        %v342 = vsel %vm340, %v312, 0
        %344 = vmatpush.msra.mxu0 0.0
        %345 = vmatpush.msra.mxu0 0.0
        %346 = vmatpush.msra.mxu0 0.0
        %347 = vmatpush.msra.mxu0 0.0
        %348 = vmatpush.msra.mxu0 0.0
        %349 = vmatpush.msra.mxu0 0.0
        %350 = vmatpush.msra.mxu0 0.0
        %351 = vmatpush.msra.mxu0 0.0
        %352 = vmatpush.msra.mxu0 0.0
        %353 = vmatpush.msra.mxu0 0.0
        %354 = vmatpush.msra.mxu0 0.0
        %355 = vmatpush.msra.mxu0 0.0
        %356 = vmatpush.msra.mxu0 0.0
        %357 = vmatpush.msra.mxu0 0.0
        %358 = vmatpush.msra.mxu0 0.0
        %359 = vmatpush.msra.mxu0 %v342
        %360 = vmatmul.f32.gmra.mxu0 %v338
        %v361 = vpop.f32.mrf.mxu0
        %v362 = vadd.f32 0.0, %v361
        %363 = vdwg.mxu0
        %v365 = vsel %vm336, %v333, 0
        %v368 = vsel %vm340, %v324, 0
        %370 = vmatpush.msra.mxu0 0.0
        %371 = vmatpush.msra.mxu0 0.0
        %372 = vmatpush.msra.mxu0 0.0
        %373 = vmatpush.msra.mxu0 0.0
        %374 = vmatpush.msra.mxu0 0.0
        %375 = vmatpush.msra.mxu0 0.0
        %376 = vmatpush.msra.mxu0 0.0
        %377 = vmatpush.msra.mxu0 0.0
        %378 = vmatpush.msra.mxu0 0.0
        %379 = vmatpush.msra.mxu0 0.0
        %380 = vmatpush.msra.mxu0 0.0
        %381 = vmatpush.msra.mxu0 0.0
        %382 = vmatpush.msra.mxu0 0.0
        %383 = vmatpush.msra.mxu0 0.0
        %384 = vmatpush.msra.mxu0 0.0
        %385 = vmatpush.msra.mxu0 %v368
        %386 = vmatmul.f32.gmra.mxu0 %v365
        %v387 = vpop.f32.mrf.mxu0
        %v388 = vadd.f32 %v362, %v387
        %389 = vdwg.mxu0
        %s390 = scalar_lea.vmem %s1, 16
        %v391 = vld [vmem:[%s390] sm:$0xff]
        %v393 = vsel %vm336, %v391, 0
        %v396 = vsel %vm340, %v332, 0
        %398 = vmatpush.msra.mxu0 0.0
        %399 = vmatpush.msra.mxu0 0.0
        %400 = vmatpush.msra.mxu0 0.0
        %401 = vmatpush.msra.mxu0 0.0
        %402 = vmatpush.msra.mxu0 0.0
        %403 = vmatpush.msra.mxu0 0.0
        %404 = vmatpush.msra.mxu0 0.0
        %405 = vmatpush.msra.mxu0 0.0
        %406 = vmatpush.msra.mxu0 0.0
        %407 = vmatpush.msra.mxu0 0.0
        %408 = vmatpush.msra.mxu0 0.0
        %409 = vmatpush.msra.mxu0 0.0
        %410 = vmatpush.msra.mxu0 0.0
        %411 = vmatpush.msra.mxu0 0.0
        %412 = vmatpush.msra.mxu0 0.0
        %413 = vmatpush.msra.mxu0 %v396
        %414 = vmatmul.f32.gmra.mxu0 %v393
        %v415 = vpop.f32.mrf.mxu0
        %v416 = vadd.f32 0.0, %v415
        %417 = vdwg.mxu0
        %v418 = vadd.f32 %v388, %v416
        %v419 = vld [vmem:[%s2] sm:$0xff]
        %421 = vset.pattern.permute.xlu0 0
        %422 = vperm.xlu0 %421, %v419
        %v423 = vpop.permute.xlu0 %422
        %v425 = vadd.f32 %v418, %v423
        %s426 = sld [smem:[#allocation2]]
        %vm427 = vcmp.ge.f32.partialorder %v425, 0.0
        %v428 = vstv %s426
        %v429 = vmul.f32 %v428, %v425
        %v430 = vsel %vm427, %v425, %v429
        %431 = vst [vmem:[%s287] sm:$0xff] %v430
        %p432 = scmp.eq.s32.totalorder %s27, 0
        // Predicated region
        $region41: #{tpu_custom_call.1} parent=39 // pred_check
          %p433 = pneg %p432
        $region42: #{tpu_custom_call.1} parent=39 // pred_check_branch
          %435 = sbr.rel (%p433) target = $region44
        $region43: #{tpu_custom_call.1} parent=39 // pred_region
          %vm436 = vcmask 15360
          %437 = vst.msk [vmem:[%s311] sm:$0xff] %vm436, 0.0
        $region44: #{tpu_custom_call.1} parent=39 // pred_fallthru
          _
        %p438 = scmp.ne.s32.totalorder %s27, 0
        // Predicated region
        $region45: #{tpu_custom_call.1} parent=39 // pred_check
          %p439 = pneg %p438
        $region46: #{tpu_custom_call.1} parent=39 // pred_check_branch
          %441 = sbr.rel (%p439) target = $region48
        $region47: #{tpu_custom_call.1} parent=39 // pred_region
          %442 = vadd.xlane.f32.xlu0 %v430
          %v443 = vpop.xlane.xlu0 %442
          %v444 = vmul.f32 %v430, %v430
          %445 = vadd.xlane.f32.xlu0 %v444
          %v446 = vpop.xlane.xlu0 %445
          %v447 = vld [vmem:[%s311] sm:$0xff]
          %vm448 = vcmask 7168
          %v449 = vsel %vm448, %v443, %v446
          %v450 = vadd.f32 %v447, %v449
          %vm451 = vcmask 15360
          %452 = vst.msk [vmem:[%s311] sm:$0xff] %vm451, %v450
        $region48: #{tpu_custom_call.1} parent=39 // pred_fallthru
          _
        // Predicated region
        $region49: #{tpu_custom_call.1} parent=39 // pred_check
          %p453 = pneg %p432
        $region50: #{tpu_custom_call.1} parent=39 // pred_check_branch
          %455 = sbr.rel (%p453) target = $region52
        $region51: #{tpu_custom_call.1} parent=39 // pred_region
          %s456 = smul.u32 %s27, 128
          %v457 = vstv %s456
          %v458 = vadd.s32 %v314, %v457
          %vm459 = vcmp.lt.s32.totalorder %v458, 16
          %v460 = vsel %vm459, %v430, 0.0
          %461 = vadd.xlane.f32.xlu0 %v460
          %v462 = vpop.xlane.xlu0 %461
          %v463 = vmul.f32 %v460, %v430
          %464 = vadd.xlane.f32.xlu0 %v463
          %v465 = vpop.xlane.xlu0 %464
          %v466 = vld [vmem:[%s311] sm:$0xff]
          %vm467 = vcmask 7168
          %v468 = vsel %vm467, %v462, %v465
          %v469 = vadd.f32 %v466, %v468
          %vm470 = vcmask 15360
          %471 = vst.msk [vmem:[%s311] sm:$0xff] %vm470, %v469
        $region52: #{tpu_custom_call.1} parent=39 // pred_fallthru
          _
        %s472 = sand.u32 %s163, 1
        %s473 = scalar_lea.sflag [#allocation4], %s472
        %s474 = sand.u32 %s163, 1
        %s475 = smul.addr %s474, 8
        %s476 = scalar_lea.vmem [#allocation3], %s475
        %p477 = scmp.lt.s32.totalorder %s26, 1
        %s478 = scalar_select %p477, %s26, 1
        %s479 = smul.addr %s478, 8
        %s480 = scalar_lea.vmem %s6, %s479
        // Predicated region
        $region53: #{tpu_custom_call.1} parent=39 // pred_check
          %p481 = pneg %p173
        $region54: #{tpu_custom_call.1} parent=39 // pred_check_branch
          %483 = sbr.rel (%p481) target = $region56
        $region55: #{tpu_custom_call.1} parent=39 // pred_region
          %485 = vsyncadd %s473, 0
          %s486 = sadd.s32 %s27, %s26
          %s487 = smul.addr %s486, 8
          %s488 = scalar_lea.hbm %s5, %s487
          %s490 = sshll.u32 %s476, 4
          %s491 = int_to_ptr.vmem [resolvable:$true] %s490
          %s492 = sshll.u32 %s488, 4
          %s493 = int_to_ptr.hbm [resolvable:$true] %s492
          %495 = dma.vmem_to_hbm [thread:$0]  %s491, 128, %s493, %s473
        $region56: #{tpu_custom_call.1} parent=39 // pred_fallthru
          _
        // Predicated region
        $region57: #{tpu_custom_call.1} parent=39 // pred_check
          %p496 = pneg %p199
        $region58: #{tpu_custom_call.1} parent=39 // pred_check_branch
          %498 = sbr.rel (%p496) target = $region60
        $region59: #{tpu_custom_call.1} parent=39 // pred_region
          _
        $region60: #{tpu_custom_call.1} parent=39 // pred_fallthru
          _
      $region40: #{tpu_custom_call.1} parent=5 // pred_fallthru
        _
      %p499 = scmp.le.s32.totalorder 2, %s17
      // Predicated region
      $region61: #{tpu_custom_call.1} parent=5 // pred_check
        %p500 = pneg %p499
      $region62: #{tpu_custom_call.1} parent=5 // pred_check_branch
        %502 = sbr.rel (%p500) target = $region64
      $region63: #{tpu_custom_call.1} parent=5 // pred_region
        %s503 = ssub.s32 %s17, 2
        // Predicated region
        $region65: #{tpu_custom_call.1} parent=63 // pred_check
          %p504 = pneg %p179
        $region66: #{tpu_custom_call.1} parent=63 // pred_check_branch
          %506 = sbr.rel (%p504) target = $region68
        $region67: #{tpu_custom_call.1} parent=63 // pred_region
          %s507 = sand.u32 %s164, 1
          %s508 = scalar_lea.sflag [#allocation4], %s507
          %s509 = sand.u32 %s164, 1
          %s510 = smul.addr %s509, 8
          %s511 = scalar_lea.vmem [#allocation3], %s510
          %513 = dma.done %s508, 128
        $region68: #{tpu_custom_call.1} parent=63 // pred_fallthru
          _
        // Predicated region
        $region69: #{tpu_custom_call.1} parent=63 // pred_check
          %p514 = pneg %p205
        $region70: #{tpu_custom_call.1} parent=63 // pred_check_branch
          %516 = sbr.rel (%p514) target = $region72
        $region71: #{tpu_custom_call.1} parent=63 // pred_region
          %p517 = scmp.lt.s32.totalorder %s28, 1
          %s518 = scalar_select %p517, %s28, 1
          %s519 = smul.addr %s518, 8
          %s520 = scalar_lea.vmem %s6, %s519
        $region72: #{tpu_custom_call.1} parent=63 // pred_fallthru
          _
      $region64: #{tpu_custom_call.1} parent=5 // pred_fallthru
        _
    $region6: #{tpu_custom_call.1} parent=1 // loop_footer
      %s21 = sadd.s32 1, %s17
    $region7: #{tpu_custom_call.1} parent=1 // loop_footer_branch
      %16 = sbr.rel target = $region3
    $region8: #{tpu_custom_call.1} parent=1 // loop_exit
      _
    %521 = vsyncpa [#allocation4], 1
    %s522 = scalar_lea.sflag [#allocation4], 1
    %523 = vsyncpa %s522, 1

</llo_original>
